<compile_context>
chip_gen: v6e
topology: v6e:2x2x1
jax: 0.10.0
libtpu: 0.0.40
codegen_flags: <defaults>
</compile_context>

<pallas_src>
import jax
import jax.numpy as jnp
from jax.experimental import pallas as pl
from jax.experimental.pallas import tpu as pltpu


def _round_up(x, m):
    return (x + m - 1) // m * m


def _descriptor_kernel(x_ref, w_ref, b_ref, out_ref):
    """One grid step = one tile of TM pixels, full K-layer chain in-kernel.

    x_ref:   (TM, Cp)     pixel tile, channels lane-dense (last dim)
    w_ref:   (K, Cp, Cp)  all weights, pre-transposed to (in, out)
    b_ref:   (K, 1, Cp)   all biases
    out_ref: (K, TM, Cp)  one output slab per conv layer
    """
    num_layers = out_ref.shape[0]
    state = x_ref[...].astype(jnp.float32)
    for k in range(num_layers):  # static unroll; K is known at trace time
        y = jnp.dot(state, w_ref[k], preferred_element_type=jnp.float32) + b_ref[k]
        y_out = y.astype(out_ref.dtype)
        out_ref[k] = y_out
        # Propagate the emitted (possibly down-cast) value, matching the
        # PyTorch chain exactly; keep the working copy in f32 for the MXU.
        state = y_out.astype(jnp.float32)


def descriptor_forward(x_nchw, weights, biases, *, tile_m=1024,
                       vmem_budget_bytes=24 * 1024 * 1024):
    """x_nchw: (N, C, H, W); weights: (K, C_out, C_in); biases: (K, C_out).

    Returns a list of K arrays, each (N, C, H, W) — matching the PyTorch module.
    """
    N, C, H, W = x_nchw.shape
    K, c_out, c_in = weights.shape
    assert c_in == C and c_out == C, "chained 1x1 convs require in_dim == out_dim"
    M = N * H * W

    itemsize = jnp.dtype(x_nchw.dtype).itemsize
    # Lane-dense channel padding (multiple of 128) + sublane-aligned M tiling.
    cp = _round_up(C, 128)

    # Size the pixel tile so double-buffered (x tile + K output slabs) plus the
    # resident weights fit comfortably in scoped VMEM.
    w_bytes = K * cp * cp * 4 + K * cp * 4
    per_row_bytes = 2 * (1 + K) * cp * itemsize  # x + K outs, double-buffered
    tm_cap = max(8, (vmem_budget_bytes - w_bytes) // per_row_bytes)
    tm = min(tile_m, tm_cap, _round_up(M, 8))
    tm = _round_up(tm, 8)
    m_pad = _round_up(M, tm)
    grid_m = m_pad // tm

    # NCHW -> (M, C) channels-last, zero-padded to (m_pad, cp).
    # TODO(synk): if the surrounding model can stay NHWC, these transposes (and
    # the per-layer transpose back) can be dropped entirely.
    x_mat = jnp.transpose(x_nchw, (0, 2, 3, 1)).reshape(M, C)
    x_mat = jnp.pad(x_mat, ((0, m_pad - M), (0, cp - C)))

    # Pre-transpose weights to (K, in, out) so the kernel does state @ w[k]
    # (no in-kernel w.T / XLU relayout). Zero-pad channels; padded output
    # channels get zero weight and zero bias, so the chain stays exact.
    w_t = jnp.transpose(weights, (0, 2, 1)).astype(jnp.float32)
    w_t = jnp.pad(w_t, ((0, 0), (0, cp - C), (0, cp - C)))
    b3 = jnp.pad(biases.astype(jnp.float32), ((0, 0), (0, cp - C))).reshape(K, 1, cp)

    flops = 2 * K * m_pad * cp * cp
    bytes_accessed = (
        m_pad * cp * itemsize          # x read
        + K * cp * cp * 4 + K * cp * 4  # weights + biases
        + K * m_pad * cp * itemsize    # outputs written
    )

    out = pl.pallas_call(
        _descriptor_kernel,
        out_shape=jax.ShapeDtypeStruct((K, m_pad, cp), x_nchw.dtype),
        grid_spec=pltpu.PrefetchScalarGridSpec(
            num_scalar_prefetch=0,
            grid=(grid_m,),
            in_specs=[
                pl.BlockSpec((tm, cp), lambda m: (m, 0)),        # pixel tile
                pl.BlockSpec((K, cp, cp), lambda m: (0, 0, 0)),  # all weights (fetched once)
                pl.BlockSpec((K, 1, cp), lambda m: (0, 0, 0)),   # all biases  (fetched once)
            ],
            out_specs=pl.BlockSpec((K, tm, cp), lambda m: (0, m, 0)),
        ),
        compiler_params=pltpu.CompilerParams(
            # Pixel tiles are independent -> megacore-shardable on v7x.
            dimension_semantics=("parallel",),
        ),
        cost_estimate=pl.CostEstimate(
            flops=flops, transcendentals=0, bytes_accessed=bytes_accessed
        ),
    )(x_mat, w_t, b3)

    # (K, m_pad, cp) -> list of NCHW tensors (strip padding first).
    out = out[:, :M, :C].reshape(K, N, H, W, C).transpose(0, 1, 4, 2, 3)
    return [out[k] for k in range(K)]


def _reference_forward(x_nchw, weights, biases):
    """Plain-JAX reference of the chained 1x1 convs."""
    K = weights.shape[0]
    outs = []
    cur = x_nchw
    for k in range(K):
        cur = (
            jnp.einsum("oc,nchw->nohw", weights[k], cur)
            + biases[k][None, :, None, None]
        )
        outs.append(cur)
    return outs


if __name__ == "__main__":
    # Small shapes: in_dim == out_dim (required by the module's chained forward).
    N, C, H, W = 2, 32, 8, 8          # M = N*H*W = 128
    K = 4                              # centroids_nums

    key = jax.random.PRNGKey(0)
    kx, kw, kb = jax.random.split(key, 3)
    x = jax.random.normal(kx, (N, C, H, W), dtype=jnp.float32)
    # Deterministic "conv" parameters (kernel_size=1 -> weight (out, in)).
    weights = jax.random.normal(kw, (K, C, C), dtype=jnp.float32) * 0.05
    biases = jax.random.normal(kb, (K, C), dtype=jnp.float32) * 0.01

    outs = descriptor_forward(x, weights, biases)
    outs = [jax.block_until_ready(o) for o in outs]

    refs = _reference_forward(x, weights, biases)
    for o, r in zip(outs, refs):
        assert o.shape == r.shape
        assert jnp.allclose(o, r, atol=1e-4, rtol=1e-4)

    print("KERNEL_OK")
</pallas_src>

<mosaic_0001>
module attributes {stable_mosaic.version = 11 : i64} {
  func.func @_descriptor_kernel(%arg0: i32, %arg1: memref<128x128xf32, #tpu.memory_space<vmem>>, %arg2: memref<4x128x128xf32, #tpu.memory_space<vmem>>, %arg3: memref<4x1x128xf32, #tpu.memory_space<vmem>>, %arg4: memref<4x128x128xf32, #tpu.memory_space<vmem>>) attributes {dimension_semantics = [#tpu.dimension_semantics<parallel>], iteration_bounds = array<i64: 1>, scalar_prefetch = 0 : i64, scratch_operands = 0 : i64, tpu.core_type = #tpu.core_type<tc>, window_params = [{transform_indices = @transform_0, window_bounds = array<i64: 128, 128>}, {pipeline_mode = #tpu.pipeline_mode<synchronous>, transform_indices = @transform_1, window_bounds = array<i64: 4, 128, 128>}, {pipeline_mode = #tpu.pipeline_mode<synchronous>, transform_indices = @transform_2, window_bounds = array<i64: 4, 1, 128>}, {transform_indices = @transform_3, window_bounds = array<i64: 4, 128, 128>}]} {
    %c0 = arith.constant 0 : index
    %c0_0 = arith.constant 0 : index
    %0 = vector.load %arg1[%c0, %c0_0] : memref<128x128xf32, #tpu.memory_space<vmem>>, vector<128x128xf32>
    %c0_1 = arith.constant 0 : index
    %c0_2 = arith.constant 0 : index
    %c0_3 = arith.constant 0 : index
    %1 = vector.load %arg2[%c0_1, %c0_2, %c0_3] : memref<4x128x128xf32, #tpu.memory_space<vmem>>, vector<1x128x128xf32>
    %2 = vector.shape_cast %1 : vector<1x128x128xf32> to vector<128x128xf32>
    %cst = arith.constant dense<0.000000e+00> : vector<128x128xf32>
    %3 = tpu.matmul %0, %2, %cst {dimension_numbers = #tpu.dot_dimension_numbers<[1], [0], [0], [1], [0, 0, 1, 1], [], []>} : vector<128x128xf32>, vector<128x128xf32>, vector<128x128xf32> -> vector<128x128xf32>
    %c0_4 = arith.constant 0 : index
    %c0_5 = arith.constant 0 : index
    %c0_6 = arith.constant 0 : index
    %4 = vector.load %arg3[%c0_4, %c0_5, %c0_6] : memref<4x1x128xf32, #tpu.memory_space<vmem>>, vector<1x1x128xf32>
    %5 = vector.shape_cast %4 : vector<1x1x128xf32> to vector<1x128xf32>
    %6 = vector.broadcast %5 : vector<1x128xf32> to vector<128x128xf32>
    %7 = arith.addf %3, %6 : vector<128x128xf32>
    %c0_7 = arith.constant 0 : index
    %c0_8 = arith.constant 0 : index
    %c0_9 = arith.constant 0 : index
    %8 = vector.load %arg4[%c0_7, %c0_8, %c0_9] : memref<4x128x128xf32, #tpu.memory_space<vmem>>, vector<1x128x128xf32>
    %9 = vector.shape_cast %8 : vector<1x128x128xf32> to vector<128x128xf32>
    %10 = vector.shape_cast %7 : vector<128x128xf32> to vector<1x128x128xf32>
    tpu.vector_store %arg4[%c0_7, %c0_8, %c0_9], %10 {strides = array<i32>} : memref<4x128x128xf32, #tpu.memory_space<vmem>>, vector<1x128x128xf32>,
    %c1 = arith.constant 1 : index
    %c0_10 = arith.constant 0 : index
    %c0_11 = arith.constant 0 : index
    %11 = vector.load %arg2[%c1, %c0_10, %c0_11] : memref<4x128x128xf32, #tpu.memory_space<vmem>>, vector<1x128x128xf32>
    %12 = vector.shape_cast %11 : vector<1x128x128xf32> to vector<128x128xf32>
    %cst_12 = arith.constant dense<0.000000e+00> : vector<128x128xf32>
    %13 = tpu.matmul %7, %12, %cst_12 {dimension_numbers = #tpu.dot_dimension_numbers<[1], [0], [0], [1], [0, 0, 1, 1], [], []>} : vector<128x128xf32>, vector<128x128xf32>, vector<128x128xf32> -> vector<128x128xf32>
    %c1_13 = arith.constant 1 : index
    %c0_14 = arith.constant 0 : index
    %c0_15 = arith.constant 0 : index
    %14 = vector.load %arg3[%c1_13, %c0_14, %c0_15] : memref<4x1x128xf32, #tpu.memory_space<vmem>>, vector<1x1x128xf32>
    %15 = vector.shape_cast %14 : vector<1x1x128xf32> to vector<1x128xf32>
    %16 = vector.broadcast %15 : vector<1x128xf32> to vector<128x128xf32>
    %17 = arith.addf %13, %16 : vector<128x128xf32>
    %c1_16 = arith.constant 1 : index
    %c0_17 = arith.constant 0 : index
    %c0_18 = arith.constant 0 : index
    %18 = vector.load %arg4[%c1_16, %c0_17, %c0_18] : memref<4x128x128xf32, #tpu.memory_space<vmem>>, vector<1x128x128xf32>
    %19 = vector.shape_cast %18 : vector<1x128x128xf32> to vector<128x128xf32>
    %20 = vector.shape_cast %17 : vector<128x128xf32> to vector<1x128x128xf32>
    tpu.vector_store %arg4[%c1_16, %c0_17, %c0_18], %20 {strides = array<i32>} : memref<4x128x128xf32, #tpu.memory_space<vmem>>, vector<1x128x128xf32>,
    %c2 = arith.constant 2 : index
    %c0_19 = arith.constant 0 : index
    %c0_20 = arith.constant 0 : index
    %21 = vector.load %arg2[%c2, %c0_19, %c0_20] : memref<4x128x128xf32, #tpu.memory_space<vmem>>, vector<1x128x128xf32>
    %22 = vector.shape_cast %21 : vector<1x128x128xf32> to vector<128x128xf32>
    %cst_21 = arith.constant dense<0.000000e+00> : vector<128x128xf32>
    %23 = tpu.matmul %17, %22, %cst_21 {dimension_numbers = #tpu.dot_dimension_numbers<[1], [0], [0], [1], [0, 0, 1, 1], [], []>} : vector<128x128xf32>, vector<128x128xf32>, vector<128x128xf32> -> vector<128x128xf32>
    %c2_22 = arith.constant 2 : index
    %c0_23 = arith.constant 0 : index
    %c0_24 = arith.constant 0 : index
    %24 = vector.load %arg3[%c2_22, %c0_23, %c0_24] : memref<4x1x128xf32, #tpu.memory_space<vmem>>, vector<1x1x128xf32>
    %25 = vector.shape_cast %24 : vector<1x1x128xf32> to vector<1x128xf32>
    %26 = vector.broadcast %25 : vector<1x128xf32> to vector<128x128xf32>
    %27 = arith.addf %23, %26 : vector<128x128xf32>
    %c2_25 = arith.constant 2 : index
    %c0_26 = arith.constant 0 : index
    %c0_27 = arith.constant 0 : index
    %28 = vector.load %arg4[%c2_25, %c0_26, %c0_27] : memref<4x128x128xf32, #tpu.memory_space<vmem>>, vector<1x128x128xf32>
    %29 = vector.shape_cast %28 : vector<1x128x128xf32> to vector<128x128xf32>
    %30 = vector.shape_cast %27 : vector<128x128xf32> to vector<1x128x128xf32>
    tpu.vector_store %arg4[%c2_25, %c0_26, %c0_27], %30 {strides = array<i32>} : memref<4x128x128xf32, #tpu.memory_space<vmem>>, vector<1x128x128xf32>,
    %c3 = arith.constant 3 : index
    %c0_28 = arith.constant 0 : index
    %c0_29 = arith.constant 0 : index
    %31 = vector.load %arg2[%c3, %c0_28, %c0_29] : memref<4x128x128xf32, #tpu.memory_space<vmem>>, vector<1x128x128xf32>
    %32 = vector.shape_cast %31 : vector<1x128x128xf32> to vector<128x128xf32>
    %cst_30 = arith.constant dense<0.000000e+00> : vector<128x128xf32>
    %33 = tpu.matmul %27, %32, %cst_30 {dimension_numbers = #tpu.dot_dimension_numbers<[1], [0], [0], [1], [0, 0, 1, 1], [], []>} : vector<128x128xf32>, vector<128x128xf32>, vector<128x128xf32> -> vector<128x128xf32>
    %c3_31 = arith.constant 3 : index
    %c0_32 = arith.constant 0 : index
    %c0_33 = arith.constant 0 : index
    %34 = vector.load %arg3[%c3_31, %c0_32, %c0_33] : memref<4x1x128xf32, #tpu.memory_space<vmem>>, vector<1x1x128xf32>
    %35 = vector.shape_cast %34 : vector<1x1x128xf32> to vector<1x128xf32>
    %36 = vector.broadcast %35 : vector<1x128xf32> to vector<128x128xf32>
    %37 = arith.addf %33, %36 : vector<128x128xf32>
    %c3_34 = arith.constant 3 : index
    %c0_35 = arith.constant 0 : index
    %c0_36 = arith.constant 0 : index
    %38 = vector.load %arg4[%c3_34, %c0_35, %c0_36] : memref<4x128x128xf32, #tpu.memory_space<vmem>>, vector<1x128x128xf32>
    %39 = vector.shape_cast %38 : vector<1x128x128xf32> to vector<128x128xf32>
    %40 = vector.shape_cast %37 : vector<128x128xf32> to vector<1x128x128xf32>
    tpu.vector_store %arg4[%c3_34, %c0_35, %c0_36], %40 {strides = array<i32>} : memref<4x128x128xf32, #tpu.memory_space<vmem>>, vector<1x128x128xf32>,
    return
  }
  func.func @transform_0(%arg0: i32) -> (i32, i32) {
    %c0_i32 = arith.constant 0 : i32
    %c0_i32_0 = arith.constant 0 : i32
    return %arg0, %c0_i32 : i32, i32
  }
  func.func @transform_1(%arg0: i32) -> (i32, i32, i32) {
    %c0_i32 = arith.constant 0 : i32
    %c0_i32_0 = arith.constant 0 : i32
    %c0_i32_1 = arith.constant 0 : i32
    %c0_i32_2 = arith.constant 0 : i32
    return %c0_i32, %c0_i32_0, %c0_i32_1 : i32, i32, i32
  }
  func.func @transform_2(%arg0: i32) -> (i32, i32, i32) {
    %c0_i32 = arith.constant 0 : i32
    %c0_i32_0 = arith.constant 0 : i32
    %c0_i32_1 = arith.constant 0 : i32
    %c0_i32_2 = arith.constant 0 : i32
    return %c0_i32, %c0_i32_0, %c0_i32_1 : i32, i32, i32
  }
  func.func @transform_3(%arg0: i32) -> (i32, i32, i32) {
    %c0_i32 = arith.constant 0 : i32
    %c0_i32_0 = arith.constant 0 : i32
    %c0_i32_1 = arith.constant 0 : i32
    return %c0_i32, %arg0, %c0_i32_0 : i32, i32, i32
  }
}

</mosaic_0001>

<llo_original>
// kernel: tpu_custom_call.1
$region0: #{tpu_custom_call.1}
  #allocation0 [shape = 'u32[]', space=smem, size = 0x4, offset = 0x4, fixed_abs, tag = 'smem constant byte address 0x4 - core index']
  #allocation1 [shape = 'u32[144,128]{1,0:T(1,128)}', space=vmem, size = 0x12000, scoped, tag = 'internal scratch']
  %s0 = inlined_call_operand.hbm [shape: f32[128,128], index: 0, kind: input, shape index: {}]
  %s1 = inlined_call_operand.hbm [shape: f32[4,128,128], index: 1, kind: input, shape index: {}]
  %s2 = inlined_call_operand.hbm [shape: f32[4,1,128], index: 2, kind: input, shape index: {}]
  %s3 = inlined_call_operand.hbm [shape: f32[4,128,128], index: 3, kind: output, shape index: {}]
  %s4 = sld [smem:[#allocation0]]
  $region34: #{tpu_custom_call.1} parent=0
    _
  %s6 = ssub.s32 1, %s4
  %s7 = scalar_select 0, %s6, %s4
  $region1: #{tpu_custom_call.1} parent=0
    #allocation2 [shape = 'u8[65536]{0}', space=vmem, size = 0x10000, scoped, tag = 'input window, operand 0, single buffered']
    #allocation3 [shape = 's32[1]{0}', space=sflag, size = 0x4, scoped, tag = 'scoped memory for tpu_custom_call.1']
    #allocation4 [shape = 's32[1]{0}', space=sflag, size = 0x4, scoped, tag = 'scoped memory for tpu_custom_call.1']
    #allocation5 [shape = 'u8[262144]{0}', space=vmem, size = 0x40000, scoped, tag = 'input window, operand 1, single buffered']
    #allocation6 [shape = 's32[1]{0}', space=sflag, size = 0x4, scoped, tag = 'scoped memory for tpu_custom_call.1']
    #allocation7 [shape = 'u8[2048]{0}', space=vmem, size = 0x800, scoped, tag = 'input window, operand 2, single buffered']
    #allocation8 [shape = 'u8[262144]{0}', space=vmem, size = 0x40000, scoped, tag = 'output window, operand 0, single buffered']
    %8 = vsyncpa [#allocation3], 0
    %9 = vsyncpa [#allocation6], 0
    %10 = vsyncpa [#allocation4], 0
    // Predicated region
    $region2: #{tpu_custom_call.1} parent=1 // pred_check
      _
    $region3: #{tpu_custom_call.1} parent=1 // pred_check_branch
      %12 = sbr.rel (0) target = $region5
    $region4: #{tpu_custom_call.1} parent=1 // pred_region
      %s14 = ssub.s32 2048, 2048
      %15 = vsyncadd [#allocation3], %s14
      %s16 = sshll.u32 [#allocation2], 4
      %s17 = int_to_ptr.vmem [resolvable:$true] %s16
      %22 = dma.hbm_to_vmem [thread:$0]  %s0, 2048, %s17, [#allocation3], 128, 128, 8
    $region5: #{tpu_custom_call.1} parent=1 // pred_fallthru
      _
    // Predicated region
    $region6: #{tpu_custom_call.1} parent=1 // pred_check
      _
    $region7: #{tpu_custom_call.1} parent=1 // pred_check_branch
      %24 = sbr.rel (0) target = $region9
    $region8: #{tpu_custom_call.1} parent=1 // pred_region
      %s26 = ssub.s32 8192, 8192
      %27 = vsyncadd [#allocation6], %s26
      %s28 = sshll.u32 [#allocation5], 4
      %s29 = int_to_ptr.vmem [resolvable:$true] %s28
      %34 = dma.hbm_to_vmem [thread:$0]  %s1, 8192, %s29, [#allocation6], 128, 128, 8
    $region9: #{tpu_custom_call.1} parent=1 // pred_fallthru
      _
    // Predicated region
    $region10: #{tpu_custom_call.1} parent=1 // pred_check
      _
    $region11: #{tpu_custom_call.1} parent=1 // pred_check_branch
      %36 = sbr.rel (0) target = $region13
    $region12: #{tpu_custom_call.1} parent=1 // pred_region
      %s38 = ssub.s32 64, 64
      %39 = vsyncadd [#allocation6], %s38
      %s40 = sshll.u32 [#allocation7], 4
      %s41 = int_to_ptr.vmem [resolvable:$true] %s40
      %46 = dma.hbm_to_vmem [thread:$0]  %s2, 64, %s41, [#allocation6], 16, 16, 1
    $region13: #{tpu_custom_call.1} parent=1 // pred_fallthru
      _
    // Predicated region
    $region14: #{tpu_custom_call.1} parent=1 // pred_check
      _
    $region15: #{tpu_custom_call.1} parent=1 // pred_check_branch
      %48 = sbr.rel (0) target = $region17
    $region16: #{tpu_custom_call.1} parent=1 // pred_region
      %49 = dma.done [#allocation3], 2048
    $region17: #{tpu_custom_call.1} parent=1 // pred_fallthru
      _
    // Predicated region
    $region18: #{tpu_custom_call.1} parent=1 // pred_check
      _
    $region19: #{tpu_custom_call.1} parent=1 // pred_check_branch
      %51 = sbr.rel (0) target = $region21
    $region20: #{tpu_custom_call.1} parent=1 // pred_region
      %52 = dma.done [#allocation6], 8192
    $region21: #{tpu_custom_call.1} parent=1 // pred_fallthru
      _
    // Predicated region
    $region22: #{tpu_custom_call.1} parent=1 // pred_check
      _
    $region23: #{tpu_custom_call.1} parent=1 // pred_check_branch
      %54 = sbr.rel (0) target = $region25
    $region24: #{tpu_custom_call.1} parent=1 // pred_region
      %55 = dma.done [#allocation6], 64
    $region25: #{tpu_custom_call.1} parent=1 // pred_fallthru
      _
    %v56 = vld [vmem:[#allocation2] sm:$0xff]
    %v57 = vld [vmem:[#allocation2 + $0x8] sm:$0xff]
    %v58 = vld [vmem:[#allocation2 + $0x10] sm:$0xff]
    %v59 = vld [vmem:[#allocation2 + $0x18] sm:$0xff]
    %v60 = vld [vmem:[#allocation2 + $0x20] sm:$0xff]
    %v61 = vld [vmem:[#allocation2 + $0x28] sm:$0xff]
    %v62 = vld [vmem:[#allocation2 + $0x30] sm:$0xff]
    %v63 = vld [vmem:[#allocation2 + $0x38] sm:$0xff]
    %v64 = vld [vmem:[#allocation2 + $0x40] sm:$0xff]
    %v65 = vld [vmem:[#allocation2 + $0x48] sm:$0xff]
    %v66 = vld [vmem:[#allocation2 + $0x50] sm:$0xff]
    %v67 = vld [vmem:[#allocation2 + $0x58] sm:$0xff]
    %v68 = vld [vmem:[#allocation2 + $0x60] sm:$0xff]
    %v69 = vld [vmem:[#allocation2 + $0x68] sm:$0xff]
    %v70 = vld [vmem:[#allocation2 + $0x70] sm:$0xff]
    %v71 = vld [vmem:[#allocation2 + $0x78] sm:$0xff]
    %v72 = vld [vmem:[#allocation5] sm:$0xff]
    %v73 = vld [vmem:[#allocation5 + $0x8] sm:$0xff]
    %v74 = vld [vmem:[#allocation5 + $0x10] sm:$0xff]
    %v75 = vld [vmem:[#allocation5 + $0x18] sm:$0xff]
    %v76 = vld [vmem:[#allocation5 + $0x20] sm:$0xff]
    %v77 = vld [vmem:[#allocation5 + $0x28] sm:$0xff]
    %v78 = vld [vmem:[#allocation5 + $0x30] sm:$0xff]
    %v79 = vld [vmem:[#allocation5 + $0x38] sm:$0xff]
    %v80 = vld [vmem:[#allocation5 + $0x40] sm:$0xff]
    %v81 = vld [vmem:[#allocation5 + $0x48] sm:$0xff]
    %v82 = vld [vmem:[#allocation5 + $0x50] sm:$0xff]
    %v83 = vld [vmem:[#allocation5 + $0x58] sm:$0xff]
    %v84 = vld [vmem:[#allocation5 + $0x60] sm:$0xff]
    %v85 = vld [vmem:[#allocation5 + $0x68] sm:$0xff]
    %v86 = vld [vmem:[#allocation5 + $0x70] sm:$0xff]
    %v87 = vld [vmem:[#allocation5 + $0x78] sm:$0xff]
    %v88 = vld [vmem:[#allocation7] sm:$0x1]
    %v90 = vlaneseq
    %v91 = vshrl.u32 %v90, 7
    %v92 = vsub.s32 0, %v91
    %v93 = vrot.slane %v88, %v92
    %95 = vmatprep.subr.mxu0 0.0
    %96 = vmatpush1.msra.mxu0 %v87
    %97 = vmatprep.subr.mxu0 0.0
    %98 = vmatpush1.msra.mxu0 %v86
    %99 = vmatprep.subr.mxu0 0.0
    %100 = vmatpush1.msra.mxu0 %v85
    %101 = vmatprep.subr.mxu0 0.0
    %102 = vmatpush1.msra.mxu0 %v84
    %103 = vmatprep.subr.mxu0 0.0
    %104 = vmatpush1.msra.mxu0 %v83
    %105 = vmatprep.subr.mxu0 0.0
    %106 = vmatpush1.msra.mxu0 %v82
    %107 = vmatprep.subr.mxu0 0.0
    %108 = vmatpush1.msra.mxu0 %v81
    %109 = vmatprep.subr.mxu0 0.0
    %110 = vmatpush1.msra.mxu0 %v80
    %111 = vmatprep.subr.mxu0 0.0
    %112 = vmatpush1.msra.mxu0 %v79
    %113 = vmatprep.subr.mxu0 0.0
    %114 = vmatpush1.msra.mxu0 %v78
    %115 = vmatprep.subr.mxu0 0.0
    %116 = vmatpush1.msra.mxu0 %v77
    %117 = vmatprep.subr.mxu0 0.0
    %118 = vmatpush1.msra.mxu0 %v76
    %119 = vmatprep.subr.mxu0 0.0
    %120 = vmatpush1.msra.mxu0 %v75
    %121 = vmatprep.subr.mxu0 0.0
    %122 = vmatpush1.msra.mxu0 %v74
    %123 = vmatprep.subr.mxu0 0.0
    %124 = vmatpush1.msra.mxu0 %v73
    %125 = vmatprep.subr.mxu0 0.0
    %126 = vmatpush1.msra.mxu0 %v72
    %127 = vmatprep.subr.mxu0 0.0
    %128 = vmatpush2.msra.mxu0 0.0
    %129 = vmatprep.subr.mxu0 0.0
    %130 = vmatpush2.msra.mxu0 0.0
    %131 = vmatprep.subr.mxu0 0.0
    %132 = vmatpush2.msra.mxu0 0.0
    %133 = vmatprep.subr.mxu0 0.0
    %134 = vmatpush2.msra.mxu0 0.0
    %135 = vmatprep.subr.mxu0 0.0
    %136 = vmatpush2.msra.mxu0 0.0
    %137 = vmatprep.subr.mxu0 0.0
    %138 = vmatpush2.msra.mxu0 0.0
    %139 = vmatprep.subr.mxu0 0.0
    %140 = vmatpush2.msra.mxu0 0.0
    %141 = vmatprep.subr.mxu0 0.0
    %142 = vmatpush2.msra.mxu0 0.0
    %143 = vmatprep.subr.mxu0 0.0
    %144 = vmatpush2.msra.mxu0 0.0
    %145 = vmatprep.subr.mxu0 0.0
    %146 = vmatpush2.msra.mxu0 0.0
    %147 = vmatprep.subr.mxu0 0.0
    %148 = vmatpush2.msra.mxu0 0.0
    %149 = vmatprep.subr.mxu0 0.0
    %150 = vmatpush2.msra.mxu0 0.0
    %151 = vmatprep.subr.mxu0 0.0
    %152 = vmatpush2.msra.mxu0 0.0
    %153 = vmatprep.subr.mxu0 0.0
    %154 = vmatpush2.msra.mxu0 0.0
    %155 = vmatprep.subr.mxu0 0.0
    %156 = vmatpush2.msra.mxu0 0.0
    %157 = vmatprep.subr.mxu0 0.0
    %158 = vmatpush2.msra.mxu0 0.0
    %159 = vmatprep.mubr.f32.mxu0 0.0
    %160 = vmatmul.mubr.f32.gmra.mxu0 %v56
    %v161 = vpop.f32.mrf.mxu0
    %v162 = vadd.f32 %v93, %v161
    %v163 = vpop.f32.mrf.mxu0
    %164 = vmatprep.mubr.f32.mxu0 0.0
    %165 = vmatmul.mubr.f32.gmra.mxu0 %v57
    %v166 = vpop.f32.mrf.mxu0
    %v167 = vadd.f32 %v93, %v166
    %v168 = vpop.f32.mrf.mxu0
    %169 = vmatprep.mubr.f32.mxu0 0.0
    %170 = vmatmul.mubr.f32.gmra.mxu0 %v58
    %v171 = vpop.f32.mrf.mxu0
    %v172 = vadd.f32 %v93, %v171
    %v173 = vpop.f32.mrf.mxu0
    %174 = vmatprep.mubr.f32.mxu0 0.0
    %175 = vmatmul.mubr.f32.gmra.mxu0 %v59
    %v176 = vpop.f32.mrf.mxu0
    %v177 = vadd.f32 %v93, %v176
    %v178 = vpop.f32.mrf.mxu0
    %179 = vmatprep.mubr.f32.mxu0 0.0
    %180 = vmatmul.mubr.f32.gmra.mxu0 %v60
    %v181 = vpop.f32.mrf.mxu0
    %v182 = vadd.f32 %v93, %v181
    %v183 = vpop.f32.mrf.mxu0
    %184 = vmatprep.mubr.f32.mxu0 0.0
    %185 = vmatmul.mubr.f32.gmra.mxu0 %v61
    %v186 = vpop.f32.mrf.mxu0
    %v187 = vadd.f32 %v93, %v186
    %v188 = vpop.f32.mrf.mxu0
    %189 = vmatprep.mubr.f32.mxu0 0.0
    %190 = vmatmul.mubr.f32.gmra.mxu0 %v62
    %v191 = vpop.f32.mrf.mxu0
    %v192 = vadd.f32 %v93, %v191
    %v193 = vpop.f32.mrf.mxu0
    %194 = vmatprep.mubr.f32.mxu0 0.0
    %195 = vmatmul.mubr.f32.gmra.mxu0 %v63
    %v196 = vpop.f32.mrf.mxu0
    %v197 = vadd.f32 %v93, %v196
    %v198 = vpop.f32.mrf.mxu0
    %199 = vmatprep.mubr.f32.mxu0 0.0
    %200 = vmatmul.mubr.f32.gmra.mxu0 %v64
    %v201 = vpop.f32.mrf.mxu0
    %v202 = vadd.f32 %v93, %v201
    %v203 = vpop.f32.mrf.mxu0
    %204 = vmatprep.mubr.f32.mxu0 0.0
    %205 = vmatmul.mubr.f32.gmra.mxu0 %v65
    %v206 = vpop.f32.mrf.mxu0
    %v207 = vadd.f32 %v93, %v206
    %v208 = vpop.f32.mrf.mxu0
    %209 = vmatprep.mubr.f32.mxu0 0.0
    %210 = vmatmul.mubr.f32.gmra.mxu0 %v66
    %v211 = vpop.f32.mrf.mxu0
    %v212 = vadd.f32 %v93, %v211
    %v213 = vpop.f32.mrf.mxu0
    %214 = vmatprep.mubr.f32.mxu0 0.0
    %215 = vmatmul.mubr.f32.gmra.mxu0 %v67
    %v216 = vpop.f32.mrf.mxu0
    %v217 = vadd.f32 %v93, %v216
    %v218 = vpop.f32.mrf.mxu0
    %219 = vmatprep.mubr.f32.mxu0 0.0
    %220 = vmatmul.mubr.f32.gmra.mxu0 %v68
    %v221 = vpop.f32.mrf.mxu0
    %v222 = vadd.f32 %v93, %v221
    %v223 = vpop.f32.mrf.mxu0
    %224 = vmatprep.mubr.f32.mxu0 0.0
    %225 = vmatmul.mubr.f32.gmra.mxu0 %v69
    %v226 = vpop.f32.mrf.mxu0
    %v227 = vadd.f32 %v93, %v226
    %v228 = vpop.f32.mrf.mxu0
    %229 = vmatprep.mubr.f32.mxu0 0.0
    %230 = vmatmul.mubr.f32.gmra.mxu0 %v70
    %v231 = vpop.f32.mrf.mxu0
    %v232 = vadd.f32 %v93, %v231
    %v233 = vpop.f32.mrf.mxu0
    %234 = vmatprep.mubr.f32.mxu0 0.0
    %235 = vmatmul.mubr.f32.gmra.mxu0 %v71
    %v236 = vpop.f32.mrf.mxu0
    %v237 = vadd.f32 %v93, %v236
    %v238 = vpop.f32.mrf.mxu0
    %239 = vdwg.mxu0
    %240 = vst [vmem:[#allocation8] sm:$0xff] %v162
    %241 = vst [vmem:[#allocation8 + $0x8] sm:$0xff] %v167
    %242 = vst [vmem:[#allocation8 + $0x10] sm:$0xff] %v172
    %243 = vst [vmem:[#allocation8 + $0x18] sm:$0xff] %v177
    %244 = vst [vmem:[#allocation8 + $0x20] sm:$0xff] %v182
    %245 = vst [vmem:[#allocation8 + $0x28] sm:$0xff] %v187
    %246 = vst [vmem:[#allocation8 + $0x30] sm:$0xff] %v192
    %247 = vst [vmem:[#allocation8 + $0x38] sm:$0xff] %v197
    %248 = vst [vmem:[#allocation8 + $0x40] sm:$0xff] %v202
    %249 = vst [vmem:[#allocation8 + $0x48] sm:$0xff] %v207
    %250 = vst [vmem:[#allocation8 + $0x50] sm:$0xff] %v212
    %251 = vst [vmem:[#allocation8 + $0x58] sm:$0xff] %v217
    %252 = vst [vmem:[#allocation8 + $0x60] sm:$0xff] %v222
    %253 = vst [vmem:[#allocation8 + $0x68] sm:$0xff] %v227
    %254 = vst [vmem:[#allocation8 + $0x70] sm:$0xff] %v232
    %255 = vst [vmem:[#allocation8 + $0x78] sm:$0xff] %v237
    %s256 = scalar_lea.vmem [#allocation5], 128
    %v257 = vld [vmem:[%s256] sm:$0xff]
    %v258 = vld [vmem:[%s256 + $0x8] sm:$0xff]
    %v259 = vld [vmem:[%s256 + $0x10] sm:$0xff]
    %v260 = vld [vmem:[%s256 + $0x18] sm:$0xff]
    %v261 = vld [vmem:[%s256 + $0x20] sm:$0xff]
    %v262 = vld [vmem:[%s256 + $0x28] sm:$0xff]
    %v263 = vld [vmem:[%s256 + $0x30] sm:$0xff]
    %v264 = vld [vmem:[%s256 + $0x38] sm:$0xff]
    %v265 = vld [vmem:[%s256 + $0x40] sm:$0xff]
    %v266 = vld [vmem:[%s256 + $0x48] sm:$0xff]
    %v267 = vld [vmem:[%s256 + $0x50] sm:$0xff]
    %v268 = vld [vmem:[%s256 + $0x58] sm:$0xff]
    %v269 = vld [vmem:[%s256 + $0x60] sm:$0xff]
    %v270 = vld [vmem:[%s256 + $0x68] sm:$0xff]
    %v271 = vld [vmem:[%s256 + $0x70] sm:$0xff]
    %v272 = vld [vmem:[%s256 + $0x78] sm:$0xff]
    %s273 = scalar_lea.vmem [#allocation7], 1
    %v274 = vld [vmem:[%s273] sm:$0x1]
    %v276 = vlaneseq
    %v277 = vshrl.u32 %v276, 7
    %v278 = vsub.s32 0, %v277
    %v279 = vrot.slane %v274, %v278
    %281 = vmatprep.subr.mxu0 0.0
    %282 = vmatpush1.msra.mxu0 %v272
    %283 = vmatprep.subr.mxu0 0.0
    %284 = vmatpush1.msra.mxu0 %v271
    %285 = vmatprep.subr.mxu0 0.0
    %286 = vmatpush1.msra.mxu0 %v270
    %287 = vmatprep.subr.mxu0 0.0
    %288 = vmatpush1.msra.mxu0 %v269
    %289 = vmatprep.subr.mxu0 0.0
    %290 = vmatpush1.msra.mxu0 %v268
    %291 = vmatprep.subr.mxu0 0.0
    %292 = vmatpush1.msra.mxu0 %v267
    %293 = vmatprep.subr.mxu0 0.0
    %294 = vmatpush1.msra.mxu0 %v266
    %295 = vmatprep.subr.mxu0 0.0
    %296 = vmatpush1.msra.mxu0 %v265
    %297 = vmatprep.subr.mxu0 0.0
    %298 = vmatpush1.msra.mxu0 %v264
    %299 = vmatprep.subr.mxu0 0.0
    %300 = vmatpush1.msra.mxu0 %v263
    %301 = vmatprep.subr.mxu0 0.0
    %302 = vmatpush1.msra.mxu0 %v262
    %303 = vmatprep.subr.mxu0 0.0
    %304 = vmatpush1.msra.mxu0 %v261
    %305 = vmatprep.subr.mxu0 0.0
    %306 = vmatpush1.msra.mxu0 %v260
    %307 = vmatprep.subr.mxu0 0.0
    %308 = vmatpush1.msra.mxu0 %v259
    %309 = vmatprep.subr.mxu0 0.0
    %310 = vmatpush1.msra.mxu0 %v258
    %311 = vmatprep.subr.mxu0 0.0
    %312 = vmatpush1.msra.mxu0 %v257
    %313 = vmatprep.subr.mxu0 0.0
    %314 = vmatpush2.msra.mxu0 0.0
    %315 = vmatprep.subr.mxu0 0.0
    %316 = vmatpush2.msra.mxu0 0.0
    %317 = vmatprep.subr.mxu0 0.0
    %318 = vmatpush2.msra.mxu0 0.0
    %319 = vmatprep.subr.mxu0 0.0
    %320 = vmatpush2.msra.mxu0 0.0
    %321 = vmatprep.subr.mxu0 0.0
    %322 = vmatpush2.msra.mxu0 0.0
    %323 = vmatprep.subr.mxu0 0.0
    %324 = vmatpush2.msra.mxu0 0.0
    %325 = vmatprep.subr.mxu0 0.0
    %326 = vmatpush2.msra.mxu0 0.0
    %327 = vmatprep.subr.mxu0 0.0
    %328 = vmatpush2.msra.mxu0 0.0
    %329 = vmatprep.subr.mxu0 0.0
    %330 = vmatpush2.msra.mxu0 0.0
    %331 = vmatprep.subr.mxu0 0.0
    %332 = vmatpush2.msra.mxu0 0.0
    %333 = vmatprep.subr.mxu0 0.0
    %334 = vmatpush2.msra.mxu0 0.0
    %335 = vmatprep.subr.mxu0 0.0
    %336 = vmatpush2.msra.mxu0 0.0
    %337 = vmatprep.subr.mxu0 0.0
    %338 = vmatpush2.msra.mxu0 0.0
    %339 = vmatprep.subr.mxu0 0.0
    %340 = vmatpush2.msra.mxu0 0.0
    %341 = vmatprep.subr.mxu0 0.0
    %342 = vmatpush2.msra.mxu0 0.0
    %343 = vmatprep.subr.mxu0 0.0
    %344 = vmatpush2.msra.mxu0 0.0
    %345 = vmatprep.mubr.f32.mxu0 0.0
    %346 = vmatmul.mubr.f32.gmra.mxu0 %v162
    %v347 = vpop.f32.mrf.mxu0
    %v348 = vadd.f32 %v279, %v347
    %v349 = vpop.f32.mrf.mxu0
    %350 = vmatprep.mubr.f32.mxu0 0.0
    %351 = vmatmul.mubr.f32.gmra.mxu0 %v167
    %v352 = vpop.f32.mrf.mxu0
    %v353 = vadd.f32 %v279, %v352
    %v354 = vpop.f32.mrf.mxu0
    %355 = vmatprep.mubr.f32.mxu0 0.0
    %356 = vmatmul.mubr.f32.gmra.mxu0 %v172
    %v357 = vpop.f32.mrf.mxu0
    %v358 = vadd.f32 %v279, %v357
    %v359 = vpop.f32.mrf.mxu0
    %360 = vmatprep.mubr.f32.mxu0 0.0
    %361 = vmatmul.mubr.f32.gmra.mxu0 %v177
    %v362 = vpop.f32.mrf.mxu0
    %v363 = vadd.f32 %v279, %v362
    %v364 = vpop.f32.mrf.mxu0
    %365 = vmatprep.mubr.f32.mxu0 0.0
    %366 = vmatmul.mubr.f32.gmra.mxu0 %v182
    %v367 = vpop.f32.mrf.mxu0
    %v368 = vadd.f32 %v279, %v367
    %v369 = vpop.f32.mrf.mxu0
    %370 = vmatprep.mubr.f32.mxu0 0.0
    %371 = vmatmul.mubr.f32.gmra.mxu0 %v187
    %v372 = vpop.f32.mrf.mxu0
    %v373 = vadd.f32 %v279, %v372
    %v374 = vpop.f32.mrf.mxu0
    %375 = vmatprep.mubr.f32.mxu0 0.0
    %376 = vmatmul.mubr.f32.gmra.mxu0 %v192
    %v377 = vpop.f32.mrf.mxu0
    %v378 = vadd.f32 %v279, %v377
    %v379 = vpop.f32.mrf.mxu0
    %380 = vmatprep.mubr.f32.mxu0 0.0
    %381 = vmatmul.mubr.f32.gmra.mxu0 %v197
    %v382 = vpop.f32.mrf.mxu0
    %v383 = vadd.f32 %v279, %v382
    %v384 = vpop.f32.mrf.mxu0
    %385 = vmatprep.mubr.f32.mxu0 0.0
    %386 = vmatmul.mubr.f32.gmra.mxu0 %v202
    %v387 = vpop.f32.mrf.mxu0
    %v388 = vadd.f32 %v279, %v387
    %v389 = vpop.f32.mrf.mxu0
    %390 = vmatprep.mubr.f32.mxu0 0.0
    %391 = vmatmul.mubr.f32.gmra.mxu0 %v207
    %v392 = vpop.f32.mrf.mxu0
    %v393 = vadd.f32 %v279, %v392
    %v394 = vpop.f32.mrf.mxu0
    %395 = vmatprep.mubr.f32.mxu0 0.0
    %396 = vmatmul.mubr.f32.gmra.mxu0 %v212
    %v397 = vpop.f32.mrf.mxu0
    %v398 = vadd.f32 %v279, %v397
    %v399 = vpop.f32.mrf.mxu0
    %400 = vmatprep.mubr.f32.mxu0 0.0
    %401 = vmatmul.mubr.f32.gmra.mxu0 %v217
    %v402 = vpop.f32.mrf.mxu0
    %v403 = vadd.f32 %v279, %v402
    %v404 = vpop.f32.mrf.mxu0
    %405 = vmatprep.mubr.f32.mxu0 0.0
    %406 = vmatmul.mubr.f32.gmra.mxu0 %v222
    %v407 = vpop.f32.mrf.mxu0
    %v408 = vadd.f32 %v279, %v407
    %v409 = vpop.f32.mrf.mxu0
    %410 = vmatprep.mubr.f32.mxu0 0.0
    %411 = vmatmul.mubr.f32.gmra.mxu0 %v227
    %v412 = vpop.f32.mrf.mxu0
    %v413 = vadd.f32 %v279, %v412
    %v414 = vpop.f32.mrf.mxu0
    %415 = vmatprep.mubr.f32.mxu0 0.0
    %416 = vmatmul.mubr.f32.gmra.mxu0 %v232
    %v417 = vpop.f32.mrf.mxu0
    %v418 = vadd.f32 %v279, %v417
    %v419 = vpop.f32.mrf.mxu0
    %420 = vmatprep.mubr.f32.mxu0 0.0
    %421 = vmatmul.mubr.f32.gmra.mxu0 %v237
    %v422 = vpop.f32.mrf.mxu0
    %v423 = vadd.f32 %v279, %v422
    %v424 = vpop.f32.mrf.mxu0
    %425 = vdwg.mxu0
    %s426 = scalar_lea.vmem [#allocation8], 128
    %427 = vst [vmem:[%s426] sm:$0xff] %v348
    %428 = vst [vmem:[%s426 + $0x8] sm:$0xff] %v353
    %429 = vst [vmem:[%s426 + $0x10] sm:$0xff] %v358
    %430 = vst [vmem:[%s426 + $0x18] sm:$0xff] %v363
    %431 = vst [vmem:[%s426 + $0x20] sm:$0xff] %v368
    %432 = vst [vmem:[%s426 + $0x28] sm:$0xff] %v373
    %433 = vst [vmem:[%s426 + $0x30] sm:$0xff] %v378
    %434 = vst [vmem:[%s426 + $0x38] sm:$0xff] %v383
    %435 = vst [vmem:[%s426 + $0x40] sm:$0xff] %v388
    %436 = vst [vmem:[%s426 + $0x48] sm:$0xff] %v393
    %437 = vst [vmem:[%s426 + $0x50] sm:$0xff] %v398
    %438 = vst [vmem:[%s426 + $0x58] sm:$0xff] %v403
    %439 = vst [vmem:[%s426 + $0x60] sm:$0xff] %v408
    %440 = vst [vmem:[%s426 + $0x68] sm:$0xff] %v413
    %441 = vst [vmem:[%s426 + $0x70] sm:$0xff] %v418
    %442 = vst [vmem:[%s426 + $0x78] sm:$0xff] %v423
    %s443 = scalar_lea.vmem [#allocation5], 256
    %v444 = vld [vmem:[%s443] sm:$0xff]
    %v445 = vld [vmem:[%s443 + $0x8] sm:$0xff]
    %v446 = vld [vmem:[%s443 + $0x10] sm:$0xff]
    %v447 = vld [vmem:[%s443 + $0x18] sm:$0xff]
    %v448 = vld [vmem:[%s443 + $0x20] sm:$0xff]
    %v449 = vld [vmem:[%s443 + $0x28] sm:$0xff]
    %v450 = vld [vmem:[%s443 + $0x30] sm:$0xff]
    %v451 = vld [vmem:[%s443 + $0x38] sm:$0xff]
    %v452 = vld [vmem:[%s443 + $0x40] sm:$0xff]
    %v453 = vld [vmem:[%s443 + $0x48] sm:$0xff]
    %v454 = vld [vmem:[%s443 + $0x50] sm:$0xff]
    %v455 = vld [vmem:[%s443 + $0x58] sm:$0xff]
    %v456 = vld [vmem:[%s443 + $0x60] sm:$0xff]
    %v457 = vld [vmem:[%s443 + $0x68] sm:$0xff]
    %v458 = vld [vmem:[%s443 + $0x70] sm:$0xff]
    %v459 = vld [vmem:[%s443 + $0x78] sm:$0xff]
    %s460 = scalar_lea.vmem [#allocation7], 2
    %v461 = vld [vmem:[%s460] sm:$0x1]
    %v463 = vlaneseq
    %v464 = vshrl.u32 %v463, 7
    %v465 = vsub.s32 0, %v464
    %v466 = vrot.slane %v461, %v465
    %468 = vmatprep.subr.mxu0 0.0
    %469 = vmatpush1.msra.mxu0 %v459
    %470 = vmatprep.subr.mxu0 0.0
    %471 = vmatpush1.msra.mxu0 %v458
    %472 = vmatprep.subr.mxu0 0.0
    %473 = vmatpush1.msra.mxu0 %v457
    %474 = vmatprep.subr.mxu0 0.0
    %475 = vmatpush1.msra.mxu0 %v456
    %476 = vmatprep.subr.mxu0 0.0
    %477 = vmatpush1.msra.mxu0 %v455
    %478 = vmatprep.subr.mxu0 0.0
    %479 = vmatpush1.msra.mxu0 %v454
    %480 = vmatprep.subr.mxu0 0.0
    %481 = vmatpush1.msra.mxu0 %v453
    %482 = vmatprep.subr.mxu0 0.0
    %483 = vmatpush1.msra.mxu0 %v452
    %484 = vmatprep.subr.mxu0 0.0
    %485 = vmatpush1.msra.mxu0 %v451
    %486 = vmatprep.subr.mxu0 0.0
    %487 = vmatpush1.msra.mxu0 %v450
    %488 = vmatprep.subr.mxu0 0.0
    %489 = vmatpush1.msra.mxu0 %v449
    %490 = vmatprep.subr.mxu0 0.0
    %491 = vmatpush1.msra.mxu0 %v448
    %492 = vmatprep.subr.mxu0 0.0
    %493 = vmatpush1.msra.mxu0 %v447
    %494 = vmatprep.subr.mxu0 0.0
    %495 = vmatpush1.msra.mxu0 %v446
    %496 = vmatprep.subr.mxu0 0.0
    %497 = vmatpush1.msra.mxu0 %v445
    %498 = vmatprep.subr.mxu0 0.0
    %499 = vmatpush1.msra.mxu0 %v444
    %500 = vmatprep.subr.mxu0 0.0
    %501 = vmatpush2.msra.mxu0 0.0
    %502 = vmatprep.subr.mxu0 0.0
    %503 = vmatpush2.msra.mxu0 0.0
    %504 = vmatprep.subr.mxu0 0.0
    %505 = vmatpush2.msra.mxu0 0.0
    %506 = vmatprep.subr.mxu0 0.0
    %507 = vmatpush2.msra.mxu0 0.0
    %508 = vmatprep.subr.mxu0 0.0
    %509 = vmatpush2.msra.mxu0 0.0
    %510 = vmatprep.subr.mxu0 0.0
    %511 = vmatpush2.msra.mxu0 0.0
    %512 = vmatprep.subr.mxu0 0.0
    %513 = vmatpush2.msra.mxu0 0.0
    %514 = vmatprep.subr.mxu0 0.0
    %515 = vmatpush2.msra.mxu0 0.0
    %516 = vmatprep.subr.mxu0 0.0
    %517 = vmatpush2.msra.mxu0 0.0
    %518 = vmatprep.subr.mxu0 0.0
    %519 = vmatpush2.msra.mxu0 0.0
    %520 = vmatprep.subr.mxu0 0.0
    %521 = vmatpush2.msra.mxu0 0.0
    %522 = vmatprep.subr.mxu0 0.0
    %523 = vmatpush2.msra.mxu0 0.0
    %524 = vmatprep.subr.mxu0 0.0
    %525 = vmatpush2.msra.mxu0 0.0
    %526 = vmatprep.subr.mxu0 0.0
    %527 = vmatpush2.msra.mxu0 0.0
    %528 = vmatprep.subr.mxu0 0.0
    %529 = vmatpush2.msra.mxu0 0.0
    %530 = vmatprep.subr.mxu0 0.0
    %531 = vmatpush2.msra.mxu0 0.0
    %532 = vmatprep.mubr.f32.mxu0 0.0
    %533 = vmatmul.mubr.f32.gmra.mxu0 %v348
    %v534 = vpop.f32.mrf.mxu0
    %v535 = vadd.f32 %v466, %v534
    %v536 = vpop.f32.mrf.mxu0
    %537 = vmatprep.mubr.f32.mxu0 0.0
    %538 = vmatmul.mubr.f32.gmra.mxu0 %v353
    %v539 = vpop.f32.mrf.mxu0
    %v540 = vadd.f32 %v466, %v539
    %v541 = vpop.f32.mrf.mxu0
    %542 = vmatprep.mubr.f32.mxu0 0.0
    %543 = vmatmul.mubr.f32.gmra.mxu0 %v358
    %v544 = vpop.f32.mrf.mxu0
    %v545 = vadd.f32 %v466, %v544
    %v546 = vpop.f32.mrf.mxu0
    %547 = vmatprep.mubr.f32.mxu0 0.0
    %548 = vmatmul.mubr.f32.gmra.mxu0 %v363
    %v549 = vpop.f32.mrf.mxu0
    %v550 = vadd.f32 %v466, %v549
    %v551 = vpop.f32.mrf.mxu0
    %552 = vmatprep.mubr.f32.mxu0 0.0
    %553 = vmatmul.mubr.f32.gmra.mxu0 %v368
    %v554 = vpop.f32.mrf.mxu0
    %v555 = vadd.f32 %v466, %v554
    %v556 = vpop.f32.mrf.mxu0
    %557 = vmatprep.mubr.f32.mxu0 0.0
    %558 = vmatmul.mubr.f32.gmra.mxu0 %v373
    %v559 = vpop.f32.mrf.mxu0
    %v560 = vadd.f32 %v466, %v559
    %v561 = vpop.f32.mrf.mxu0
    %562 = vmatprep.mubr.f32.mxu0 0.0
    %563 = vmatmul.mubr.f32.gmra.mxu0 %v378
    %v564 = vpop.f32.mrf.mxu0
    %v565 = vadd.f32 %v466, %v564
    %v566 = vpop.f32.mrf.mxu0
    %567 = vmatprep.mubr.f32.mxu0 0.0
    %568 = vmatmul.mubr.f32.gmra.mxu0 %v383
    %v569 = vpop.f32.mrf.mxu0
    %v570 = vadd.f32 %v466, %v569
    %v571 = vpop.f32.mrf.mxu0
    %572 = vmatprep.mubr.f32.mxu0 0.0
    %573 = vmatmul.mubr.f32.gmra.mxu0 %v388
    %v574 = vpop.f32.mrf.mxu0
    %v575 = vadd.f32 %v466, %v574
    %v576 = vpop.f32.mrf.mxu0
    %577 = vmatprep.mubr.f32.mxu0 0.0
    %578 = vmatmul.mubr.f32.gmra.mxu0 %v393
    %v579 = vpop.f32.mrf.mxu0
    %v580 = vadd.f32 %v466, %v579
    %v581 = vpop.f32.mrf.mxu0
    %582 = vmatprep.mubr.f32.mxu0 0.0
    %583 = vmatmul.mubr.f32.gmra.mxu0 %v398
    %v584 = vpop.f32.mrf.mxu0
    %v585 = vadd.f32 %v466, %v584
    %v586 = vpop.f32.mrf.mxu0
    %587 = vmatprep.mubr.f32.mxu0 0.0
    %588 = vmatmul.mubr.f32.gmra.mxu0 %v403
    %v589 = vpop.f32.mrf.mxu0
    %v590 = vadd.f32 %v466, %v589
    %v591 = vpop.f32.mrf.mxu0
    %592 = vmatprep.mubr.f32.mxu0 0.0
    %593 = vmatmul.mubr.f32.gmra.mxu0 %v408
    %v594 = vpop.f32.mrf.mxu0
    %v595 = vadd.f32 %v466, %v594
    %v596 = vpop.f32.mrf.mxu0
    %597 = vmatprep.mubr.f32.mxu0 0.0
    %598 = vmatmul.mubr.f32.gmra.mxu0 %v413
    %v599 = vpop.f32.mrf.mxu0
    %v600 = vadd.f32 %v466, %v599
    %v601 = vpop.f32.mrf.mxu0
    %602 = vmatprep.mubr.f32.mxu0 0.0
    %603 = vmatmul.mubr.f32.gmra.mxu0 %v418
    %v604 = vpop.f32.mrf.mxu0
    %v605 = vadd.f32 %v466, %v604
    %v606 = vpop.f32.mrf.mxu0
    %607 = vmatprep.mubr.f32.mxu0 0.0
    %608 = vmatmul.mubr.f32.gmra.mxu0 %v423
    %v609 = vpop.f32.mrf.mxu0
    %v610 = vadd.f32 %v466, %v609
    %v611 = vpop.f32.mrf.mxu0
    %612 = vdwg.mxu0
    %s613 = scalar_lea.vmem [#allocation8], 256
    %614 = vst [vmem:[%s613] sm:$0xff] %v535
    %615 = vst [vmem:[%s613 + $0x8] sm:$0xff] %v540
    %616 = vst [vmem:[%s613 + $0x10] sm:$0xff] %v545
    %617 = vst [vmem:[%s613 + $0x18] sm:$0xff] %v550
    %618 = vst [vmem:[%s613 + $0x20] sm:$0xff] %v555
    %619 = vst [vmem:[%s613 + $0x28] sm:$0xff] %v560
    %620 = vst [vmem:[%s613 + $0x30] sm:$0xff] %v565
    %621 = vst [vmem:[%s613 + $0x38] sm:$0xff] %v570
    %622 = vst [vmem:[%s613 + $0x40] sm:$0xff] %v575
    %623 = vst [vmem:[%s613 + $0x48] sm:$0xff] %v580
    %624 = vst [vmem:[%s613 + $0x50] sm:$0xff] %v585
    %625 = vst [vmem:[%s613 + $0x58] sm:$0xff] %v590
    %626 = vst [vmem:[%s613 + $0x60] sm:$0xff] %v595
    %627 = vst [vmem:[%s613 + $0x68] sm:$0xff] %v600
    %628 = vst [vmem:[%s613 + $0x70] sm:$0xff] %v605
    %629 = vst [vmem:[%s613 + $0x78] sm:$0xff] %v610
    %s630 = scalar_lea.vmem [#allocation5], 384
    %v631 = vld [vmem:[%s630] sm:$0xff]
    %v632 = vld [vmem:[%s630 + $0x8] sm:$0xff]
    %v633 = vld [vmem:[%s630 + $0x10] sm:$0xff]
    %v634 = vld [vmem:[%s630 + $0x18] sm:$0xff]
    %v635 = vld [vmem:[%s630 + $0x20] sm:$0xff]
    %v636 = vld [vmem:[%s630 + $0x28] sm:$0xff]
    %v637 = vld [vmem:[%s630 + $0x30] sm:$0xff]
    %v638 = vld [vmem:[%s630 + $0x38] sm:$0xff]
    %v639 = vld [vmem:[%s630 + $0x40] sm:$0xff]
    %v640 = vld [vmem:[%s630 + $0x48] sm:$0xff]
    %v641 = vld [vmem:[%s630 + $0x50] sm:$0xff]
    %v642 = vld [vmem:[%s630 + $0x58] sm:$0xff]
    %v643 = vld [vmem:[%s630 + $0x60] sm:$0xff]
    %v644 = vld [vmem:[%s630 + $0x68] sm:$0xff]
    %v645 = vld [vmem:[%s630 + $0x70] sm:$0xff]
    %v646 = vld [vmem:[%s630 + $0x78] sm:$0xff]
    %s647 = scalar_lea.vmem [#allocation7], 3
    %v648 = vld [vmem:[%s647] sm:$0x1]
    %v650 = vlaneseq
    %v651 = vshrl.u32 %v650, 7
    %v652 = vsub.s32 0, %v651
    %v653 = vrot.slane %v648, %v652
    %655 = vmatprep.subr.mxu0 0.0
    %656 = vmatpush1.msra.mxu0 %v646
    %657 = vmatprep.subr.mxu0 0.0
    %658 = vmatpush1.msra.mxu0 %v645
    %659 = vmatprep.subr.mxu0 0.0
    %660 = vmatpush1.msra.mxu0 %v644
    %661 = vmatprep.subr.mxu0 0.0
    %662 = vmatpush1.msra.mxu0 %v643
    %663 = vmatprep.subr.mxu0 0.0
    %664 = vmatpush1.msra.mxu0 %v642
    %665 = vmatprep.subr.mxu0 0.0
    %666 = vmatpush1.msra.mxu0 %v641
    %667 = vmatprep.subr.mxu0 0.0
    %668 = vmatpush1.msra.mxu0 %v640
    %669 = vmatprep.subr.mxu0 0.0
    %670 = vmatpush1.msra.mxu0 %v639
    %671 = vmatprep.subr.mxu0 0.0
    %672 = vmatpush1.msra.mxu0 %v638
    %673 = vmatprep.subr.mxu0 0.0
    %674 = vmatpush1.msra.mxu0 %v637
    %675 = vmatprep.subr.mxu0 0.0
    %676 = vmatpush1.msra.mxu0 %v636
    %677 = vmatprep.subr.mxu0 0.0
    %678 = vmatpush1.msra.mxu0 %v635
    %679 = vmatprep.subr.mxu0 0.0
    %680 = vmatpush1.msra.mxu0 %v634
    %681 = vmatprep.subr.mxu0 0.0
    %682 = vmatpush1.msra.mxu0 %v633
    %683 = vmatprep.subr.mxu0 0.0
    %684 = vmatpush1.msra.mxu0 %v632
    %685 = vmatprep.subr.mxu0 0.0
    %686 = vmatpush1.msra.mxu0 %v631
    %687 = vmatprep.subr.mxu0 0.0
    %688 = vmatpush2.msra.mxu0 0.0
    %689 = vmatprep.subr.mxu0 0.0
    %690 = vmatpush2.msra.mxu0 0.0
    %691 = vmatprep.subr.mxu0 0.0
    %692 = vmatpush2.msra.mxu0 0.0
    %693 = vmatprep.subr.mxu0 0.0
    %694 = vmatpush2.msra.mxu0 0.0
    %695 = vmatprep.subr.mxu0 0.0
    %696 = vmatpush2.msra.mxu0 0.0
    %697 = vmatprep.subr.mxu0 0.0
    %698 = vmatpush2.msra.mxu0 0.0
    %699 = vmatprep.subr.mxu0 0.0
    %700 = vmatpush2.msra.mxu0 0.0
    %701 = vmatprep.subr.mxu0 0.0
    %702 = vmatpush2.msra.mxu0 0.0
    %703 = vmatprep.subr.mxu0 0.0
    %704 = vmatpush2.msra.mxu0 0.0
    %705 = vmatprep.subr.mxu0 0.0
    %706 = vmatpush2.msra.mxu0 0.0
    %707 = vmatprep.subr.mxu0 0.0
    %708 = vmatpush2.msra.mxu0 0.0
    %709 = vmatprep.subr.mxu0 0.0
    %710 = vmatpush2.msra.mxu0 0.0
    %711 = vmatprep.subr.mxu0 0.0
    %712 = vmatpush2.msra.mxu0 0.0
    %713 = vmatprep.subr.mxu0 0.0
    %714 = vmatpush2.msra.mxu0 0.0
    %715 = vmatprep.subr.mxu0 0.0
    %716 = vmatpush2.msra.mxu0 0.0
    %717 = vmatprep.subr.mxu0 0.0
    %718 = vmatpush2.msra.mxu0 0.0
    %719 = vmatprep.mubr.f32.mxu0 0.0
    %720 = vmatmul.mubr.f32.gmra.mxu0 %v535
    %v721 = vpop.f32.mrf.mxu0
    %v722 = vadd.f32 %v653, %v721
    %v723 = vpop.f32.mrf.mxu0
    %724 = vmatprep.mubr.f32.mxu0 0.0
    %725 = vmatmul.mubr.f32.gmra.mxu0 %v540
    %v726 = vpop.f32.mrf.mxu0
    %v727 = vadd.f32 %v653, %v726
    %v728 = vpop.f32.mrf.mxu0
    %729 = vmatprep.mubr.f32.mxu0 0.0
    %730 = vmatmul.mubr.f32.gmra.mxu0 %v545
    %v731 = vpop.f32.mrf.mxu0
    %v732 = vadd.f32 %v653, %v731
    %v733 = vpop.f32.mrf.mxu0
    %734 = vmatprep.mubr.f32.mxu0 0.0
    %735 = vmatmul.mubr.f32.gmra.mxu0 %v550
    %v736 = vpop.f32.mrf.mxu0
    %v737 = vadd.f32 %v653, %v736
    %v738 = vpop.f32.mrf.mxu0
    %739 = vmatprep.mubr.f32.mxu0 0.0
    %740 = vmatmul.mubr.f32.gmra.mxu0 %v555
    %v741 = vpop.f32.mrf.mxu0
    %v742 = vadd.f32 %v653, %v741
    %v743 = vpop.f32.mrf.mxu0
    %744 = vmatprep.mubr.f32.mxu0 0.0
    %745 = vmatmul.mubr.f32.gmra.mxu0 %v560
    %v746 = vpop.f32.mrf.mxu0
    %v747 = vadd.f32 %v653, %v746
    %v748 = vpop.f32.mrf.mxu0
    %749 = vmatprep.mubr.f32.mxu0 0.0
    %750 = vmatmul.mubr.f32.gmra.mxu0 %v565
    %v751 = vpop.f32.mrf.mxu0
    %v752 = vadd.f32 %v653, %v751
    %v753 = vpop.f32.mrf.mxu0
    %754 = vmatprep.mubr.f32.mxu0 0.0
    %755 = vmatmul.mubr.f32.gmra.mxu0 %v570
    %v756 = vpop.f32.mrf.mxu0
    %v757 = vadd.f32 %v653, %v756
    %v758 = vpop.f32.mrf.mxu0
    %759 = vmatprep.mubr.f32.mxu0 0.0
    %760 = vmatmul.mubr.f32.gmra.mxu0 %v575
    %v761 = vpop.f32.mrf.mxu0
    %v762 = vadd.f32 %v653, %v761
    %v763 = vpop.f32.mrf.mxu0
    %764 = vmatprep.mubr.f32.mxu0 0.0
    %765 = vmatmul.mubr.f32.gmra.mxu0 %v580
    %v766 = vpop.f32.mrf.mxu0
    %v767 = vadd.f32 %v653, %v766
    %v768 = vpop.f32.mrf.mxu0
    %769 = vmatprep.mubr.f32.mxu0 0.0
    %770 = vmatmul.mubr.f32.gmra.mxu0 %v585
    %v771 = vpop.f32.mrf.mxu0
    %v772 = vadd.f32 %v653, %v771
    %v773 = vpop.f32.mrf.mxu0
    %774 = vmatprep.mubr.f32.mxu0 0.0
    %775 = vmatmul.mubr.f32.gmra.mxu0 %v590
    %v776 = vpop.f32.mrf.mxu0
    %v777 = vadd.f32 %v653, %v776
    %v778 = vpop.f32.mrf.mxu0
    %779 = vmatprep.mubr.f32.mxu0 0.0
    %780 = vmatmul.mubr.f32.gmra.mxu0 %v595
    %v781 = vpop.f32.mrf.mxu0
    %v782 = vadd.f32 %v653, %v781
    %v783 = vpop.f32.mrf.mxu0
    %784 = vmatprep.mubr.f32.mxu0 0.0
    %785 = vmatmul.mubr.f32.gmra.mxu0 %v600
    %v786 = vpop.f32.mrf.mxu0
    %v787 = vadd.f32 %v653, %v786
    %v788 = vpop.f32.mrf.mxu0
    %789 = vmatprep.mubr.f32.mxu0 0.0
    %790 = vmatmul.mubr.f32.gmra.mxu0 %v605
    %v791 = vpop.f32.mrf.mxu0
    %v792 = vadd.f32 %v653, %v791
    %v793 = vpop.f32.mrf.mxu0
    %794 = vmatprep.mubr.f32.mxu0 0.0
    %795 = vmatmul.mubr.f32.gmra.mxu0 %v610
    %v796 = vpop.f32.mrf.mxu0
    %v797 = vadd.f32 %v653, %v796
    %v798 = vpop.f32.mrf.mxu0
    %799 = vdwg.mxu0
    %s800 = scalar_lea.vmem [#allocation8], 384
    %801 = vst [vmem:[%s800] sm:$0xff] %v722
    %802 = vst [vmem:[%s800 + $0x8] sm:$0xff] %v727
    %803 = vst [vmem:[%s800 + $0x10] sm:$0xff] %v732
    %804 = vst [vmem:[%s800 + $0x18] sm:$0xff] %v737
    %805 = vst [vmem:[%s800 + $0x20] sm:$0xff] %v742
    %806 = vst [vmem:[%s800 + $0x28] sm:$0xff] %v747
    %807 = vst [vmem:[%s800 + $0x30] sm:$0xff] %v752
    %808 = vst [vmem:[%s800 + $0x38] sm:$0xff] %v757
    %809 = vst [vmem:[%s800 + $0x40] sm:$0xff] %v762
    %810 = vst [vmem:[%s800 + $0x48] sm:$0xff] %v767
    %811 = vst [vmem:[%s800 + $0x50] sm:$0xff] %v772
    %812 = vst [vmem:[%s800 + $0x58] sm:$0xff] %v777
    %813 = vst [vmem:[%s800 + $0x60] sm:$0xff] %v782
    %814 = vst [vmem:[%s800 + $0x68] sm:$0xff] %v787
    %815 = vst [vmem:[%s800 + $0x70] sm:$0xff] %v792
    %816 = vst [vmem:[%s800 + $0x78] sm:$0xff] %v797
    // Predicated region
    $region26: #{tpu_custom_call.1} parent=1 // pred_check
      _
    $region27: #{tpu_custom_call.1} parent=1 // pred_check_branch
      %818 = sbr.rel (0) target = $region29
    $region28: #{tpu_custom_call.1} parent=1 // pred_region
      %s820 = ssub.s32 8192, 8192
      %821 = vsyncadd [#allocation4], %s820
      %s822 = sshll.u32 [#allocation8], 4
      %s823 = int_to_ptr.vmem [resolvable:$true] %s822
      %828 = dma.vmem_to_hbm [thread:$0]  %s823, 8192, %s3, [#allocation4], 128, 128, 8
    $region29: #{tpu_custom_call.1} parent=1 // pred_fallthru
      _
    // Predicated region
    $region30: #{tpu_custom_call.1} parent=1 // pred_check
      _
    $region31: #{tpu_custom_call.1} parent=1 // pred_check_branch
      %830 = sbr.rel (0) target = $region33
    $region32: #{tpu_custom_call.1} parent=1 // pred_region
      %831 = dma.done [#allocation4], 8192
    $region33: #{tpu_custom_call.1} parent=1 // pred_fallthru
      _
    %832 = vsyncpa [#allocation3], 1
    %833 = vsyncpa [#allocation6], 1
    %834 = vsyncpa [#allocation4], 1

</llo_original>
